<compile_context>
chip_gen: v5e
topology: v5e:2x2
jax: 0.10.0
libtpu: 0.0.40
codegen_flags: <defaults>
</compile_context>

<pallas_src>
import math

import jax
import jax.numpy as jnp
from jax.experimental import pallas as pl
from jax.experimental.pallas import tpu as pltpu


# Shapes smaller than this (in bytes) are cheaper through plain XLA than a pallas_call.
_BYPASS_BYTES = 512 * 1024


def _pe_add_kernel(x_ref, pe_ref, o_ref):
    # x_ref:  (TD, TS)   one (d_model, seq) tile, batch squeezed
    # pe_ref: (TS, TD)   matching positional-encoding tile (reused across batch)
    # o_ref:  (TS, TD)   lane-dense in d_model
    x_t = x_ref[...].T                                    # 2-D tile transpose -> XLU
    o_ref[...] = (x_t + pe_ref[...]).astype(o_ref.dtype)  # VPU add, unmasked vst


def _pick_tile(dim: int, target: int) -> int:
    """Tile size for `dim`: a 128-multiple <= min(target, dim); full dim if dim <= 128.

    128-multiples satisfy the (8,128) layout rule even when `dim` is ragged (Pallas pads
    the last block).  `dim <= 128` only happens for the seq axis (d_model<128 is bypassed);
    using the full extent there is legal and never the output lane dim.
    """
    if dim <= 128:
        return dim
    t = min(target, dim)
    return (t // 128) * 128


def make_positional_encoding_table(d_model: int, max_len: int = 2000) -> jnp.ndarray:
    """Deterministic pe buffer, identical to the torch __init__ construction."""
    position = jnp.arange(max_len, dtype=jnp.float32)[:, None]                      # (max_len, 1)
    div_term = jnp.exp(
        jnp.arange(0, d_model, 2, dtype=jnp.float32) * (-math.log(10000.0) / d_model)
    )                                                                               # (d_model/2,)
    pe = jnp.zeros((max_len, d_model), dtype=jnp.float32)
    pe = pe.at[:, 0::2].set(jnp.sin(position * div_term))
    pe = pe.at[:, 1::2].set(jnp.cos(position * div_term))
    return pe


def positional_encoding_forward(
    x: jnp.ndarray,
    pe_table: jnp.ndarray,
    *,
    ts_target: int = 1024,
    td_target: int = 512,
) -> jnp.ndarray:
    """x: [batch, d_model, seq_len]  ->  [batch, seq_len, d_model] (eval-mode dropout)."""
    b, d_model, seq_len = x.shape
    if seq_len > pe_table.shape[0]:
        raise ValueError(
            f"seq_len={seq_len} exceeds pe_table max_len={pe_table.shape[0]}"
        )
    itemsize = jnp.dtype(x.dtype).itemsize
    # Match input dtype so bf16 inputs stay bf16 (halves HBM traffic, avoids f32 promote).
    pe = pe_table[:seq_len].astype(x.dtype)               # (seq_len, d_model)

    # Tiny-shape / narrow-feature bypass: XLA's fused transpose+add beats kernel launch cost
    # and avoids sub-128-lane masked stores.
    if d_model < 128 or (b * d_model * seq_len * itemsize) < _BYPASS_BYTES:
        return jnp.transpose(x, (0, 2, 1)) + pe[None, :, :]

    TS = _pick_tile(seq_len, ts_target)                   # x lane dim / pe-out sublane dim
    TD = _pick_tile(d_model, td_target)                   # pe/out lane dim / x sublane dim
    nt = pl.cdiv(seq_len, TS)
    nd = pl.cdiv(d_model, TD)

    cost = pl.CostEstimate(
        flops=b * seq_len * d_model,                      # one add per element
        transcendentals=0,
        bytes_accessed=(2 * b + 1) * seq_len * d_model * itemsize,
    )

    out = pl.pallas_call(
        _pe_add_kernel,
        out_shape=jax.ShapeDtypeStruct((b, seq_len, d_model), x.dtype),
        grid_spec=pltpu.PrefetchScalarGridSpec(
            num_scalar_prefetch=0,
            grid=(nt, nd, b),                             # batch innermost: pe tile reused
            in_specs=[
                # x: (batch, d_model, seq_len); batch squeezed -> kernel sees (TD, TS)
                pl.BlockSpec((None, TD, TS), lambda ti, di, bi: (bi, di, ti)),
                # pe: (seq_len, d_model) -> (TS, TD); constant across the batch axis
                pl.BlockSpec((TS, TD), lambda ti, di, bi: (ti, di)),
            ],
            # out: (batch, seq_len, d_model); batch squeezed -> (TS, TD), lane-dense in d
            out_specs=pl.BlockSpec((None, TS, TD), lambda ti, di, bi: (bi, ti, di)),
        ),
        compiler_params=pltpu.CompilerParams(
            # No reduction axis; every output block is written exactly once -> all parallel.
            dimension_semantics=("parallel", "parallel", "parallel"),
            vmem_limit_bytes=48 * 1024 * 1024,
        ),
        cost_estimate=cost,
    )(x, pe)
    return out


if __name__ == "__main__":
    key = jax.random.PRNGKey(0)
    k_small, k_mid, k_ragged = jax.random.split(key, 3)

    pe_table = make_positional_encoding_table(256, max_len=2000)

    # --- 1) Tiny shape consistent with the module (forward input is [batch, d_model, seq_len]).
    #        Goes through the small-shape bypass.
    b0, d0, t0 = 2, 32, 8
    x0 = jax.random.normal(k_small, (b0, d0, t0), dtype=jnp.float32)
    pe0 = make_positional_encoding_table(d0, max_len=2000)
    y0 = jax.block_until_ready(positional_encoding_forward(x0, pe0))
    ref0 = jnp.transpose(x0, (0, 2, 1)) + pe0[:t0][None, :, :]
    assert y0.shape == (b0, t0, d0)
    assert jnp.allclose(y0, ref0, atol=1e-6), "mismatch vs reference (bypass)"

    # --- 2) 128-aligned shape that exercises the Pallas kernel path.
    b1, d1, t1 = 2, 256, 384
    x1 = jax.random.normal(k_mid, (b1, d1, t1), dtype=jnp.float32)
    y1 = jax.block_until_ready(positional_encoding_forward(x1, pe_table))
    ref1 = jnp.transpose(x1, (0, 2, 1)) + pe_table[:t1][None, :, :]
    assert y1.shape == (b1, t1, d1)
    assert jnp.allclose(y1, ref1, atol=1e-6), "mismatch vs reference (aligned)"

    # --- 3) Ragged dims (neither seq_len nor d_model a multiple of 128): exercises the
    #        cdiv grid with padded/masked boundary blocks on both tiled axes.
    b2, d2, t2 = 4, 200, 312
    x2 = jax.random.normal(k_ragged, (b2, d2, t2), dtype=jnp.float32)
    pe2 = make_positional_encoding_table(d2, max_len=2000)
    y2 = jax.block_until_ready(positional_encoding_forward(x2, pe2))
    ref2 = jnp.transpose(x2, (0, 2, 1)) + pe2[:t2][None, :, :]
    assert y2.shape == (b2, t2, d2)
    assert jnp.allclose(y2, ref2, atol=1e-6), "mismatch vs reference (ragged/padded)"

    print("KERNEL_OK")
</pallas_src>

<mosaic_0001>
module attributes {stable_mosaic.version = 11 : i64} {
  func.func @_pe_add_kernel(%arg0: i32, %arg1: i32, %arg2: i32, %arg3: memref<1x256x384xf32, #tpu.memory_space<vmem>>, %arg4: memref<384x256xf32, #tpu.memory_space<vmem>>, %arg5: memref<1x384x256xf32, #tpu.memory_space<vmem>>) attributes {dimension_semantics = [#tpu.dimension_semantics<parallel>, #tpu.dimension_semantics<parallel>, #tpu.dimension_semantics<parallel>], iteration_bounds = array<i64: 1, 1, 2>, scalar_prefetch = 0 : i64, scratch_operands = 0 : i64, tpu.core_type = #tpu.core_type<tc>, window_params = [{transform_indices = @transform_0, window_bounds = array<i64: 1, 256, 384>}, {transform_indices = @transform_1, window_bounds = array<i64: 384, 256>}, {transform_indices = @transform_2, window_bounds = array<i64: 1, 384, 256>}]} {
    %c0 = arith.constant 0 : index
    %c0_0 = arith.constant 0 : index
    %c0_1 = arith.constant 0 : index
    %0 = vector.load %arg3[%c0, %c0_0, %c0_1] : memref<1x256x384xf32, #tpu.memory_space<vmem>>, vector<1x256x384xf32>
    %1 = vector.shape_cast %0 : vector<1x256x384xf32> to vector<256x384xf32>
    %2 = tpu.transpose %1, [1, 0] : vector<256x384xf32> -> vector<384x256xf32>
    %c0_2 = arith.constant 0 : index
    %c0_3 = arith.constant 0 : index
    %3 = vector.load %arg4[%c0_2, %c0_3] : memref<384x256xf32, #tpu.memory_space<vmem>>, vector<384x256xf32>
    %4 = arith.addf %2, %3 : vector<384x256xf32>
    %c0_4 = arith.constant 0 : index
    %c0_5 = arith.constant 0 : index
    %c0_6 = arith.constant 0 : index
    %5 = vector.load %arg5[%c0_4, %c0_5, %c0_6] : memref<1x384x256xf32, #tpu.memory_space<vmem>>, vector<1x384x256xf32>
    %6 = vector.shape_cast %5 : vector<1x384x256xf32> to vector<384x256xf32>
    %7 = vector.shape_cast %4 : vector<384x256xf32> to vector<1x384x256xf32>
    tpu.vector_store %arg5[%c0_4, %c0_5, %c0_6], %7 {strides = array<i32>} : memref<1x384x256xf32, #tpu.memory_space<vmem>>, vector<1x384x256xf32>,
    return
  }
  func.func @transform_0(%arg0: i32, %arg1: i32, %arg2: i32) -> (i32, i32, i32) {
    %c0_i32 = arith.constant 0 : i32
    return %arg2, %arg1, %arg0 : i32, i32, i32
  }
  func.func @transform_1(%arg0: i32, %arg1: i32, %arg2: i32) -> (i32, i32) {
    %c0_i32 = arith.constant 0 : i32
    return %arg0, %arg1 : i32, i32
  }
  func.func @transform_2(%arg0: i32, %arg1: i32, %arg2: i32) -> (i32, i32, i32) {
    %c0_i32 = arith.constant 0 : i32
    return %arg2, %arg0, %arg1 : i32, i32, i32
  }
}

</mosaic_0001>

<llo_original>
// kernel: tpu_custom_call.1
$region0: #{tpu_custom_call.1}
  #allocation0 [shape = 'u32[]', space=smem, size = 0x4, offset = 0x4, fixed_abs, tag = 'smem constant byte address 0x4 - core index']
  #allocation1 [shape = 'u32[72,128]{1,0:T(1,128)}', space=vmem, size = 0x9000, scoped, tag = 'internal scratch']
  %s0 = inlined_call_operand.hbm [shape: f32[2,256,384], index: 0, kind: input, shape index: {}]
  %s1 = inlined_call_operand.hbm [shape: f32[384,256], index: 1, kind: input, shape index: {}]
  %s2 = inlined_call_operand.hbm [shape: f32[2,384,256], index: 2, kind: output, shape index: {}]
  %s3 = sld [smem:[#allocation0]]
  $region49: #{tpu_custom_call.1} parent=0
    _
  %s5 = ssub.s32 1, %s3
  %s6 = scalar_select 0, %s5, %s3
  $region1: #{tpu_custom_call.1} parent=0
    #allocation2 [shape = 'u8[786432]{0}', space=vmem, size = 0xc0000, scoped, tag = 'input window, operand 0']
    #allocation3 [shape = 's32[2]{0}', space=sflag, size = 0x8, scoped, tag = 'scoped memory for tpu_custom_call.1']
    #allocation4 [shape = 's32[2]{0}', space=sflag, size = 0x8, scoped, tag = 'scoped memory for tpu_custom_call.1']
    #allocation5 [shape = 'u8[393216]{0}', space=vmem, size = 0x60000, scoped, tag = 'input window, operand 1, single buffered']
    #allocation6 [shape = 's32[1]{0}', space=sflag, size = 0x4, scoped, tag = 'scoped memory for tpu_custom_call.1']
    #allocation7 [shape = 'u8[786432]{0}', space=vmem, size = 0xc0000, scoped, tag = 'output window, operand 0']
    %7 = vsyncpa [#allocation3], 0
    %s8 = scalar_lea.sflag [#allocation3], 1
    %9 = vsyncpa %s8, 0
    %10 = vsyncpa [#allocation6], 0
    %11 = vsyncpa [#allocation4], 0
    %s12 = scalar_lea.sflag [#allocation4], 1
    %13 = vsyncpa %s12, 0
    loop: start=0, step=1, limit=4
    $region2: #{tpu_custom_call.1} parent=1 // loop_pre_header
      _
    $region3: #{tpu_custom_call.1} parent=1 // loop_header
      %s15 = sphi 0, %s19
      %p16 = scmp.ge.s32.totalorder %s15, 4
      %s22 = sphi 0, %s41
      %s23 = sphi 0, %s37
      %s24 = sphi 0, %s33
      %s25 = sphi 0, %s22
      %s26 = sphi 0, %s23
      %s27 = sphi 0, %s24
      %s28 = sphi 0, %s25
      %s29 = sphi 0, %s26
      %s30 = sphi 0, %s27
      %s48 = sphi 0, %s50
      %s51 = sphi 0, %s48
      %s52 = sphi 0, %s51
      %s68 = sphi 0, %s52
      %s76 = sphi 0, %s78
      %s79 = sphi 0, %s76
      %s80 = sphi 0, %s79
      %s96 = sphi 0, %s80
      %s106 = sphi 0, %s108
      %s109 = sphi 0, %s106
      %s110 = sphi 0, %s109
      %s126 = sphi 0, %s110
    $region4: #{tpu_custom_call.1} parent=1 // loop_header_branch
      %18 = sbr.rel (%p16) target = $region8
    $region5: #{tpu_custom_call.1} parent=1 // loop_body
      %s20 = ssub.s32 %s15, 1
      %s21 = ssub.s32 %s15, 2
      %s31 = sadd.s32 1, %s24
      %p32 = scmp.ge.s32.totalorder %s31, 2
      %s33 = scalar_select %p32, 0, %s31
      %s34 = sadd.s32 1, %s23
      %s35 = scalar_select %p32, %s34, %s23
      %p36 = scmp.ge.s32.totalorder %s35, 1
      %s37 = scalar_select %p36, 0, %s35
      %s38 = sadd.s32 1, %s22
      %s39 = scalar_select %p36, %s38, %s22
      %p40 = scmp.ge.s32.totalorder %s39, 1
      %s41 = scalar_select %p40, 0, %s39
      %s42 = ssub.s32 %s24, %s33
      %s43 = ssub.s32 %s23, %s37
      %s44 = sor.u32 %s42, %s43
      %s45 = ssub.s32 %s22, %s41
      %s46 = sor.u32 %s44, %s45
      %p47 = scmp.eq.s32.totalorder %s46, 0
      %s49 = sadd.s32 %s48, 1
      %s50 = scalar_select %p47, %s48, %s49
      %p53 = pneg %p47
      %p54 = scmp.eq.s32.totalorder %s15, 1
      %p55 = por %p53, %p54
      %p56 = scmp.ne.s32.totalorder %s48, %s51
      %p57 = scmp.eq.s32.totalorder %s15, 0
      %p58 = por %p56, %p57
      %p59 = scmp.ne.s32.totalorder %s48, %s51
      %p60 = scmp.eq.s32.totalorder %s20, 1
      %p61 = por %p59, %p60
      %p62 = scmp.ne.s32.totalorder %s51, %s52
      %p63 = scmp.eq.s32.totalorder %s20, 0
      %p64 = por %p62, %p63
      %p65 = scmp.ne.s32.totalorder %s51, %s52
      %p66 = scmp.eq.s32.totalorder %s21, 1
      %p67 = por %p65, %p66
      %p69 = scmp.ne.s32.totalorder %s52, %s68
      %p70 = scmp.eq.s32.totalorder %s21, 0
      %p71 = por %p69, %p70
      %s72 = ssub.s32 %s22, %s41
      %s73 = ssub.s32 %s23, %s37
      %s74 = sor.u32 %s72, %s73
      %p75 = scmp.eq.s32.totalorder %s74, 0
      %s77 = sadd.s32 %s76, 1
      %s78 = scalar_select %p75, %s76, %s77
      %p81 = pneg %p75
      %p82 = scmp.eq.s32.totalorder %s15, 1
      %p83 = por %p81, %p82
      %p84 = scmp.ne.s32.totalorder %s76, %s79
      %p85 = scmp.eq.s32.totalorder %s15, 0
      %p86 = por %p84, %p85
      %p87 = scmp.ne.s32.totalorder %s76, %s79
      %p88 = scmp.eq.s32.totalorder %s20, 1
      %p89 = por %p87, %p88
      %p90 = scmp.ne.s32.totalorder %s79, %s80
      %p91 = scmp.eq.s32.totalorder %s20, 0
      %p92 = por %p90, %p91
      %p93 = scmp.ne.s32.totalorder %s79, %s80
      %p94 = scmp.eq.s32.totalorder %s21, 1
      %p95 = por %p93, %p94
      %p97 = scmp.ne.s32.totalorder %s80, %s96
      %p98 = scmp.eq.s32.totalorder %s21, 0
      %p99 = por %p97, %p98
      %s100 = ssub.s32 %s24, %s33
      %s101 = ssub.s32 %s22, %s41
      %s102 = sor.u32 %s100, %s101
      %s103 = ssub.s32 %s23, %s37
      %s104 = sor.u32 %s102, %s103
      %p105 = scmp.eq.s32.totalorder %s104, 0
      %s107 = sadd.s32 %s106, 1
      %s108 = scalar_select %p105, %s106, %s107
      %p111 = pneg %p105
      %p112 = scmp.eq.s32.totalorder %s15, 1
      %p113 = por %p111, %p112
      %p114 = scmp.ne.s32.totalorder %s106, %s109
      %p115 = scmp.eq.s32.totalorder %s15, 0
      %p116 = por %p114, %p115
      %p117 = scmp.ne.s32.totalorder %s106, %s109
      %p118 = scmp.eq.s32.totalorder %s20, 1
      %p119 = por %p117, %p118
      %p120 = scmp.ne.s32.totalorder %s109, %s110
      %p121 = scmp.eq.s32.totalorder %s20, 0
      %p122 = por %p120, %p121
      %p123 = scmp.ne.s32.totalorder %s109, %s110
      %p124 = scmp.eq.s32.totalorder %s21, 1
      %p125 = por %p123, %p124
      %p127 = scmp.ne.s32.totalorder %s110, %s126
      %p128 = scmp.eq.s32.totalorder %s21, 0
      %p129 = por %p127, %p128
      %p130 = scmp.le.s32.totalorder 1, %s15
      %p131 = scmp.lt.s32.totalorder %s15, 3
      %p132 = pnand %p130, %p131
      %p133 = pneg %p132
      // Predicated region
      $region9: #{tpu_custom_call.1} parent=5 // pred_check
        _
      $region10: #{tpu_custom_call.1} parent=5 // pred_check_branch
        %135 = sbr.rel (%p132) target = $region12
      $region11: #{tpu_custom_call.1} parent=5 // pred_region
        %s136 = ssub.s32 %s15, 1
        // Predicated region
        $region13: #{tpu_custom_call.1} parent=11 // pred_check
          %p137 = pneg %p92
        $region14: #{tpu_custom_call.1} parent=11 // pred_check_branch
          %139 = sbr.rel (%p137) target = $region16
        $region15: #{tpu_custom_call.1} parent=11 // pred_region
          %s140 = smul.u32 48, %s25
          %s141 = smul.u32 2, %s26
          %143 = vsyncadd [#allocation6], 0
          %s144 = smul.addr %s140, 2
          %s145 = sadd.s32 %s141, %s144
          %s146 = smul.addr %s145, 8
          %s147 = scalar_lea.hbm %s1, %s146
          %s148 = sshll.u32 %s147, 4
          %s149 = int_to_ptr.hbm [resolvable:$true] %s148
          %s150 = sshll.u32 [#allocation5], 4
          %s151 = int_to_ptr.vmem [resolvable:$true] %s150
          %156 = dma.hbm_to_vmem [thread:$0]  %s149, 12288, %s151, [#allocation6], 256, 256, 16
        $region16: #{tpu_custom_call.1} parent=11 // pred_fallthru
          _
      $region12: #{tpu_custom_call.1} parent=5 // pred_fallthru
        _
      %p157 = scmp.lt.s32.totalorder %s15, 2
      // Predicated region
      $region17: #{tpu_custom_call.1} parent=5 // pred_check
        %p158 = pneg %p157
      $region18: #{tpu_custom_call.1} parent=5 // pred_check_branch
        %160 = sbr.rel (%p158) target = $region20
      $region19: #{tpu_custom_call.1} parent=5 // pred_region
        // Predicated region
        $region21: #{tpu_custom_call.1} parent=19 // pred_check
          %p161 = pneg %p58
        $region22: #{tpu_custom_call.1} parent=19 // pred_check_branch
          %163 = sbr.rel (%p161) target = $region24
        $region23: #{tpu_custom_call.1} parent=19 // pred_region
          %s164 = sand.u32 %s48, 1
          %s165 = scalar_lea.sflag [#allocation3], %s164
          %s166 = sand.u32 %s48, 1
          %s167 = smul.addr %s166, 768
          %s168 = scalar_lea.vmem [#allocation2], %s167
          %s169 = smul.u32 32, %s23
          %s170 = smul.u32 3, %s22
          %172 = vsyncadd %s165, 0
          %s173 = smul.addr %s169, 3
          %s174 = sadd.s32 %s170, %s173
          %s175 = smul.addr %s24, 96
          %s176 = sadd.s32 %s174, %s175
          %s177 = smul.addr %s176, 8
          %s178 = scalar_lea.hbm %s0, %s177
          %s179 = sshll.u32 %s178, 4
          %s180 = int_to_ptr.hbm [resolvable:$true] %s179
          %s181 = sshll.u32 %s168, 4
          %s182 = int_to_ptr.vmem [resolvable:$true] %s181
          %187 = dma.hbm_to_vmem [thread:$0]  %s180, 12288, %s182, %s165, 384, 384, 24
        $region24: #{tpu_custom_call.1} parent=19 // pred_fallthru
          _
      $region20: #{tpu_custom_call.1} parent=5 // pred_fallthru
        _
      %p188 = scmp.le.s32.totalorder 1, %s15
      %p189 = scmp.lt.s32.totalorder %s15, 3
      %p190 = pnand %p188, %p189
      %p191 = pneg %p190
      // Predicated region
      $region25: #{tpu_custom_call.1} parent=5 // pred_check
        _
      $region26: #{tpu_custom_call.1} parent=5 // pred_check_branch
        %193 = sbr.rel (%p190) target = $region28
      $region27: #{tpu_custom_call.1} parent=5 // pred_region
        %s194 = ssub.s32 %s15, 1
        %s195 = sand.u32 %s51, 1
        %s196 = scalar_lea.sflag [#allocation3], %s195
        %s197 = sand.u32 %s51, 1
        %s198 = smul.addr %s197, 768
        %s199 = scalar_lea.vmem [#allocation2], %s198
        // Predicated region
        $region29: #{tpu_custom_call.1} parent=27 // pred_check
          %p200 = pneg %p64
        $region30: #{tpu_custom_call.1} parent=27 // pred_check_branch
          %202 = sbr.rel (%p200) target = $region32
        $region31: #{tpu_custom_call.1} parent=27 // pred_region
          %204 = dma.done %s196, 12288
        $region32: #{tpu_custom_call.1} parent=27 // pred_fallthru
          _
        // Predicated region
        $region33: #{tpu_custom_call.1} parent=27 // pred_check
          %p205 = pneg %p92
        $region34: #{tpu_custom_call.1} parent=27 // pred_check_branch
          %207 = sbr.rel (%p205) target = $region36
        $region35: #{tpu_custom_call.1} parent=27 // pred_region
          %209 = dma.done [#allocation6], 12288
        $region36: #{tpu_custom_call.1} parent=27 // pred_fallthru
          _
        %s210 = sand.u32 %s51, 1
        %s211 = scalar_lea.sflag [#allocation3], %s210
        %s212 = sand.u32 %s51, 1
        %s213 = smul.addr %s212, 768
        %s214 = scalar_lea.vmem [#allocation2], %s213
        %p215 = pneg %p64
        %p216 = pneg %p61
        %p217 = pneg %p92
        %p218 = pneg %p89
        %p219 = pneg %p122
        %p220 = pneg %p119
        %s221 = sand.u32 %s109, 1
        %s222 = scalar_lea.sflag [#allocation4], %s221
        %s223 = sand.u32 %s109, 1
        %s224 = smul.addr %s223, 768
        %s225 = scalar_lea.vmem [#allocation7], %s224
        %s226 = smul.u32 32, %s26
        %s227 = smul.u32 3, %s25
        %s228 = smul.u32 48, %s25
        %s229 = smul.u32 2, %s26
        %s230 = smul.u32 48, %s25
        %s231 = smul.u32 2, %s26
        %v232 = vld [vmem:[%s199] sm:$0xff]
        %v233 = vld [vmem:[%s199 + $0x8] sm:$0xff]
        %v234 = vld [vmem:[%s199 + $0x10] sm:$0xff]
        %v235 = vld [vmem:[%s199 + $0x18] sm:$0xff]
        %v236 = vld [vmem:[%s199 + $0x20] sm:$0xff]
        %v237 = vld [vmem:[%s199 + $0x28] sm:$0xff]
        %v238 = vld [vmem:[%s199 + $0x30] sm:$0xff]
        %v239 = vld [vmem:[%s199 + $0x38] sm:$0xff]
        %v240 = vld [vmem:[%s199 + $0x40] sm:$0xff]
        %v241 = vld [vmem:[%s199 + $0x48] sm:$0xff]
        %v242 = vld [vmem:[%s199 + $0x50] sm:$0xff]
        %v243 = vld [vmem:[%s199 + $0x58] sm:$0xff]
        %v244 = vld [vmem:[%s199 + $0x60] sm:$0xff]
        %v245 = vld [vmem:[%s199 + $0x68] sm:$0xff]
        %v246 = vld [vmem:[%s199 + $0x70] sm:$0xff]
        %v247 = vld [vmem:[%s199 + $0x78] sm:$0xff]
        %v248 = vld [vmem:[%s199 + $0x80] sm:$0xff]
        %v249 = vld [vmem:[%s199 + $0x88] sm:$0xff]
        %v250 = vld [vmem:[%s199 + $0x90] sm:$0xff]
        %v251 = vld [vmem:[%s199 + $0x98] sm:$0xff]
        %v252 = vld [vmem:[%s199 + $0xa0] sm:$0xff]
        %v253 = vld [vmem:[%s199 + $0xa8] sm:$0xff]
        %v254 = vld [vmem:[%s199 + $0xb0] sm:$0xff]
        %v255 = vld [vmem:[%s199 + $0xb8] sm:$0xff]
        %v256 = vld [vmem:[%s199 + $0xc0] sm:$0xff]
        %v257 = vld [vmem:[%s199 + $0xc8] sm:$0xff]
        %v258 = vld [vmem:[%s199 + $0xd0] sm:$0xff]
        %v259 = vld [vmem:[%s199 + $0xd8] sm:$0xff]
        %v260 = vld [vmem:[%s199 + $0xe0] sm:$0xff]
        %v261 = vld [vmem:[%s199 + $0xe8] sm:$0xff]
        %v262 = vld [vmem:[%s199 + $0xf0] sm:$0xff]
        %v263 = vld [vmem:[%s199 + $0xf8] sm:$0xff]
        %v264 = vld [vmem:[%s199 + $0x100] sm:$0xff]
        %v265 = vld [vmem:[%s199 + $0x108] sm:$0xff]
        %v266 = vld [vmem:[%s199 + $0x110] sm:$0xff]
        %v267 = vld [vmem:[%s199 + $0x118] sm:$0xff]
        %v268 = vld [vmem:[%s199 + $0x120] sm:$0xff]
        %v269 = vld [vmem:[%s199 + $0x128] sm:$0xff]
        %v270 = vld [vmem:[%s199 + $0x130] sm:$0xff]
        %v271 = vld [vmem:[%s199 + $0x138] sm:$0xff]
        %v272 = vld [vmem:[%s199 + $0x140] sm:$0xff]
        %v273 = vld [vmem:[%s199 + $0x148] sm:$0xff]
        %v274 = vld [vmem:[%s199 + $0x150] sm:$0xff]
        %v275 = vld [vmem:[%s199 + $0x158] sm:$0xff]
        %v276 = vld [vmem:[%s199 + $0x160] sm:$0xff]
        %v277 = vld [vmem:[%s199 + $0x168] sm:$0xff]
        %v278 = vld [vmem:[%s199 + $0x170] sm:$0xff]
        %v279 = vld [vmem:[%s199 + $0x178] sm:$0xff]
        %v280 = vld [vmem:[%s199 + $0x180] sm:$0xff]
        %v281 = vld [vmem:[%s199 + $0x188] sm:$0xff]
        %v282 = vld [vmem:[%s199 + $0x190] sm:$0xff]
        %v283 = vld [vmem:[%s199 + $0x198] sm:$0xff]
        %v284 = vld [vmem:[%s199 + $0x1a0] sm:$0xff]
        %v285 = vld [vmem:[%s199 + $0x1a8] sm:$0xff]
        %v286 = vld [vmem:[%s199 + $0x1b0] sm:$0xff]
        %v287 = vld [vmem:[%s199 + $0x1b8] sm:$0xff]
        %v288 = vld [vmem:[%s199 + $0x1c0] sm:$0xff]
        %v289 = vld [vmem:[%s199 + $0x1c8] sm:$0xff]
        %v290 = vld [vmem:[%s199 + $0x1d0] sm:$0xff]
        %v291 = vld [vmem:[%s199 + $0x1d8] sm:$0xff]
        %v292 = vld [vmem:[%s199 + $0x1e0] sm:$0xff]
        %v293 = vld [vmem:[%s199 + $0x1e8] sm:$0xff]
        %v294 = vld [vmem:[%s199 + $0x1f0] sm:$0xff]
        %v295 = vld [vmem:[%s199 + $0x1f8] sm:$0xff]
        %v296 = vld [vmem:[%s199 + $0x200] sm:$0xff]
        %v297 = vld [vmem:[%s199 + $0x208] sm:$0xff]
        %v298 = vld [vmem:[%s199 + $0x210] sm:$0xff]
        %v299 = vld [vmem:[%s199 + $0x218] sm:$0xff]
        %v300 = vld [vmem:[%s199 + $0x220] sm:$0xff]
        %v301 = vld [vmem:[%s199 + $0x228] sm:$0xff]
        %v302 = vld [vmem:[%s199 + $0x230] sm:$0xff]
        %v303 = vld [vmem:[%s199 + $0x238] sm:$0xff]
        %v304 = vld [vmem:[%s199 + $0x240] sm:$0xff]
        %v305 = vld [vmem:[%s199 + $0x248] sm:$0xff]
        %v306 = vld [vmem:[%s199 + $0x250] sm:$0xff]
        %v307 = vld [vmem:[%s199 + $0x258] sm:$0xff]
        %v308 = vld [vmem:[%s199 + $0x260] sm:$0xff]
        %v309 = vld [vmem:[%s199 + $0x268] sm:$0xff]
        %v310 = vld [vmem:[%s199 + $0x270] sm:$0xff]
        %v311 = vld [vmem:[%s199 + $0x278] sm:$0xff]
        %v312 = vld [vmem:[%s199 + $0x280] sm:$0xff]
        %v313 = vld [vmem:[%s199 + $0x288] sm:$0xff]
        %v314 = vld [vmem:[%s199 + $0x290] sm:$0xff]
        %v315 = vld [vmem:[%s199 + $0x298] sm:$0xff]
        %v316 = vld [vmem:[%s199 + $0x2a0] sm:$0xff]
        %v317 = vld [vmem:[%s199 + $0x2a8] sm:$0xff]
        %v318 = vld [vmem:[%s199 + $0x2b0] sm:$0xff]
        %v319 = vld [vmem:[%s199 + $0x2b8] sm:$0xff]
        %v320 = vld [vmem:[%s199 + $0x2c0] sm:$0xff]
        %v321 = vld [vmem:[%s199 + $0x2c8] sm:$0xff]
        %v322 = vld [vmem:[%s199 + $0x2d0] sm:$0xff]
        %v323 = vld [vmem:[%s199 + $0x2d8] sm:$0xff]
        %v324 = vld [vmem:[%s199 + $0x2e0] sm:$0xff]
        %v325 = vld [vmem:[%s199 + $0x2e8] sm:$0xff]
        %v326 = vld [vmem:[%s199 + $0x2f0] sm:$0xff]
        %v327 = vld [vmem:[%s199 + $0x2f8] sm:$0xff]
        %328 = vxpose.xlu0.b32.start [1/16] %v232, 128
        %329 = vxpose.xlu0.b32.cont [2/16] %v235, 128
        %330 = vxpose.xlu0.b32.cont [3/16] %v238, 128
        %331 = vxpose.xlu0.b32.cont [4/16] %v241, 128
        %332 = vxpose.xlu0.b32.cont [5/16] %v244, 128
        %333 = vxpose.xlu0.b32.cont [6/16] %v247, 128
        %334 = vxpose.xlu0.b32.cont [7/16] %v250, 128
        %335 = vxpose.xlu0.b32.cont [8/16] %v253, 128
        %336 = vxpose.xlu0.b32.cont [9/16] %v256, 128
        %337 = vxpose.xlu0.b32.cont [10/16] %v259, 128
        %338 = vxpose.xlu0.b32.cont [11/16] %v262, 128
        %339 = vxpose.xlu0.b32.cont [12/16] %v265, 128
        %340 = vxpose.xlu0.b32.cont [13/16] %v268, 128
        %341 = vxpose.xlu0.b32.cont [14/16] %v271, 128
        %342 = vxpose.xlu0.b32.cont [15/16] %v274, 128
        %343 = vxpose.xlu0.b32.end [16/16] %v277, 128
        %v344 = vpop.trf.xlu0
        %v345 = vpop.trf.xlu0
        %v346 = vpop.trf.xlu0
        %v347 = vpop.trf.xlu0
        %v348 = vpop.trf.xlu0
        %v349 = vpop.trf.xlu0
        %v350 = vpop.trf.xlu0
        %v351 = vpop.trf.xlu0
        %v352 = vpop.trf.xlu0
        %v353 = vpop.trf.xlu0
        %v354 = vpop.trf.xlu0
        %v355 = vpop.trf.xlu0
        %v356 = vpop.trf.xlu0
        %v357 = vpop.trf.xlu0
        %v358 = vpop.trf.xlu0
        %v359 = vpop.trf.xlu0
        %360 = vxpose.xlu0.b32.start [1/16] %v233, 128
        %361 = vxpose.xlu0.b32.cont [2/16] %v236, 128
        %362 = vxpose.xlu0.b32.cont [3/16] %v239, 128
        %363 = vxpose.xlu0.b32.cont [4/16] %v242, 128
        %364 = vxpose.xlu0.b32.cont [5/16] %v245, 128
        %365 = vxpose.xlu0.b32.cont [6/16] %v248, 128
        %366 = vxpose.xlu0.b32.cont [7/16] %v251, 128
        %367 = vxpose.xlu0.b32.cont [8/16] %v254, 128
        %368 = vxpose.xlu0.b32.cont [9/16] %v257, 128
        %369 = vxpose.xlu0.b32.cont [10/16] %v260, 128
        %370 = vxpose.xlu0.b32.cont [11/16] %v263, 128
        %371 = vxpose.xlu0.b32.cont [12/16] %v266, 128
        %372 = vxpose.xlu0.b32.cont [13/16] %v269, 128
        %373 = vxpose.xlu0.b32.cont [14/16] %v272, 128
        %374 = vxpose.xlu0.b32.cont [15/16] %v275, 128
        %375 = vxpose.xlu0.b32.end [16/16] %v278, 128
        %v376 = vpop.trf.xlu0
        %v377 = vpop.trf.xlu0
        %v378 = vpop.trf.xlu0
        %v379 = vpop.trf.xlu0
        %v380 = vpop.trf.xlu0
        %v381 = vpop.trf.xlu0
        %v382 = vpop.trf.xlu0
        %v383 = vpop.trf.xlu0
        %v384 = vpop.trf.xlu0
        %v385 = vpop.trf.xlu0
        %v386 = vpop.trf.xlu0
        %v387 = vpop.trf.xlu0
        %v388 = vpop.trf.xlu0
        %v389 = vpop.trf.xlu0
        %v390 = vpop.trf.xlu0
        %v391 = vpop.trf.xlu0
        %392 = vxpose.xlu0.b32.start [1/16] %v234, 128
        %393 = vxpose.xlu0.b32.cont [2/16] %v237, 128
        %394 = vxpose.xlu0.b32.cont [3/16] %v240, 128
        %395 = vxpose.xlu0.b32.cont [4/16] %v243, 128
        %396 = vxpose.xlu0.b32.cont [5/16] %v246, 128
        %397 = vxpose.xlu0.b32.cont [6/16] %v249, 128
        %398 = vxpose.xlu0.b32.cont [7/16] %v252, 128
        %399 = vxpose.xlu0.b32.cont [8/16] %v255, 128
        %400 = vxpose.xlu0.b32.cont [9/16] %v258, 128
        %401 = vxpose.xlu0.b32.cont [10/16] %v261, 128
        %402 = vxpose.xlu0.b32.cont [11/16] %v264, 128
        %403 = vxpose.xlu0.b32.cont [12/16] %v267, 128
        %404 = vxpose.xlu0.b32.cont [13/16] %v270, 128
        %405 = vxpose.xlu0.b32.cont [14/16] %v273, 128
        %406 = vxpose.xlu0.b32.cont [15/16] %v276, 128
        %407 = vxpose.xlu0.b32.end [16/16] %v279, 128
        %v408 = vpop.trf.xlu0
        %v409 = vpop.trf.xlu0
        %v410 = vpop.trf.xlu0
        %v411 = vpop.trf.xlu0
        %v412 = vpop.trf.xlu0
        %v413 = vpop.trf.xlu0
        %v414 = vpop.trf.xlu0
        %v415 = vpop.trf.xlu0
        %v416 = vpop.trf.xlu0
        %v417 = vpop.trf.xlu0
        %v418 = vpop.trf.xlu0
        %v419 = vpop.trf.xlu0
        %v420 = vpop.trf.xlu0
        %v421 = vpop.trf.xlu0
        %v422 = vpop.trf.xlu0
        %v423 = vpop.trf.xlu0
        %424 = vxpose.xlu0.b32.start [1/16] %v280, 128
        %425 = vxpose.xlu0.b32.cont [2/16] %v283, 128
        %426 = vxpose.xlu0.b32.cont [3/16] %v286, 128
        %427 = vxpose.xlu0.b32.cont [4/16] %v289, 128
        %428 = vxpose.xlu0.b32.cont [5/16] %v292, 128
        %429 = vxpose.xlu0.b32.cont [6/16] %v295, 128
        %430 = vxpose.xlu0.b32.cont [7/16] %v298, 128
        %431 = vxpose.xlu0.b32.cont [8/16] %v301, 128
        %432 = vxpose.xlu0.b32.cont [9/16] %v304, 128
        %433 = vxpose.xlu0.b32.cont [10/16] %v307, 128
        %434 = vxpose.xlu0.b32.cont [11/16] %v310, 128
        %435 = vxpose.xlu0.b32.cont [12/16] %v313, 128
        %436 = vxpose.xlu0.b32.cont [13/16] %v316, 128
        %437 = vxpose.xlu0.b32.cont [14/16] %v319, 128
        %438 = vxpose.xlu0.b32.cont [15/16] %v322, 128
        %439 = vxpose.xlu0.b32.end [16/16] %v325, 128
        %v440 = vpop.trf.xlu0
        %v441 = vpop.trf.xlu0
        %v442 = vpop.trf.xlu0
        %v443 = vpop.trf.xlu0
        %v444 = vpop.trf.xlu0
        %v445 = vpop.trf.xlu0
        %v446 = vpop.trf.xlu0
        %v447 = vpop.trf.xlu0
        %v448 = vpop.trf.xlu0
        %v449 = vpop.trf.xlu0
        %v450 = vpop.trf.xlu0
        %v451 = vpop.trf.xlu0
        %v452 = vpop.trf.xlu0
        %v453 = vpop.trf.xlu0
        %v454 = vpop.trf.xlu0
        %v455 = vpop.trf.xlu0
        %456 = vxpose.xlu0.b32.start [1/16] %v281, 128
        %457 = vxpose.xlu0.b32.cont [2/16] %v284, 128
        %458 = vxpose.xlu0.b32.cont [3/16] %v287, 128
        %459 = vxpose.xlu0.b32.cont [4/16] %v290, 128
        %460 = vxpose.xlu0.b32.cont [5/16] %v293, 128
        %461 = vxpose.xlu0.b32.cont [6/16] %v296, 128
        %462 = vxpose.xlu0.b32.cont [7/16] %v299, 128
        %463 = vxpose.xlu0.b32.cont [8/16] %v302, 128
        %464 = vxpose.xlu0.b32.cont [9/16] %v305, 128
        %465 = vxpose.xlu0.b32.cont [10/16] %v308, 128
        %466 = vxpose.xlu0.b32.cont [11/16] %v311, 128
        %467 = vxpose.xlu0.b32.cont [12/16] %v314, 128
        %468 = vxpose.xlu0.b32.cont [13/16] %v317, 128
        %469 = vxpose.xlu0.b32.cont [14/16] %v320, 128
        %470 = vxpose.xlu0.b32.cont [15/16] %v323, 128
        %471 = vxpose.xlu0.b32.end [16/16] %v326, 128
        %v472 = vpop.trf.xlu0
        %v473 = vpop.trf.xlu0
        %v474 = vpop.trf.xlu0
        %v475 = vpop.trf.xlu0
        %v476 = vpop.trf.xlu0
        %v477 = vpop.trf.xlu0
        %v478 = vpop.trf.xlu0
        %v479 = vpop.trf.xlu0
        %v480 = vpop.trf.xlu0
        %v481 = vpop.trf.xlu0
        %v482 = vpop.trf.xlu0
        %v483 = vpop.trf.xlu0
        %v484 = vpop.trf.xlu0
        %v485 = vpop.trf.xlu0
        %v486 = vpop.trf.xlu0
        %v487 = vpop.trf.xlu0
        %488 = vxpose.xlu0.b32.start [1/16] %v282, 128
        %489 = vxpose.xlu0.b32.cont [2/16] %v285, 128
        %490 = vxpose.xlu0.b32.cont [3/16] %v288, 128
        %491 = vxpose.xlu0.b32.cont [4/16] %v291, 128
        %492 = vxpose.xlu0.b32.cont [5/16] %v294, 128
        %493 = vxpose.xlu0.b32.cont [6/16] %v297, 128
        %494 = vxpose.xlu0.b32.cont [7/16] %v300, 128
        %495 = vxpose.xlu0.b32.cont [8/16] %v303, 128
        %496 = vxpose.xlu0.b32.cont [9/16] %v306, 128
        %497 = vxpose.xlu0.b32.cont [10/16] %v309, 128
        %498 = vxpose.xlu0.b32.cont [11/16] %v312, 128
        %499 = vxpose.xlu0.b32.cont [12/16] %v315, 128
        %500 = vxpose.xlu0.b32.cont [13/16] %v318, 128
        %501 = vxpose.xlu0.b32.cont [14/16] %v321, 128
        %502 = vxpose.xlu0.b32.cont [15/16] %v324, 128
        %503 = vxpose.xlu0.b32.end [16/16] %v327, 128
        %v504 = vpop.trf.xlu0
        %v505 = vpop.trf.xlu0
        %v506 = vpop.trf.xlu0
        %v507 = vpop.trf.xlu0
        %v508 = vpop.trf.xlu0
        %v509 = vpop.trf.xlu0
        %v510 = vpop.trf.xlu0
        %v511 = vpop.trf.xlu0
        %v512 = vpop.trf.xlu0
        %v513 = vpop.trf.xlu0
        %v514 = vpop.trf.xlu0
        %v515 = vpop.trf.xlu0
        %v516 = vpop.trf.xlu0
        %v517 = vpop.trf.xlu0
        %v518 = vpop.trf.xlu0
        %v519 = vpop.trf.xlu0
        %v520 = vld [vmem:[#allocation5] sm:$0xff]
        %v521 = vld [vmem:[#allocation5 + $0x8] sm:$0xff]
        %v522 = vld [vmem:[#allocation5 + $0x10] sm:$0xff]
        %v523 = vld [vmem:[#allocation5 + $0x18] sm:$0xff]
        %v524 = vld [vmem:[#allocation5 + $0x20] sm:$0xff]
        %v525 = vld [vmem:[#allocation5 + $0x28] sm:$0xff]
        %v526 = vld [vmem:[#allocation5 + $0x30] sm:$0xff]
        %v527 = vld [vmem:[#allocation5 + $0x38] sm:$0xff]
        %v528 = vld [vmem:[#allocation5 + $0x40] sm:$0xff]
        %v529 = vld [vmem:[#allocation5 + $0x48] sm:$0xff]
        %v530 = vld [vmem:[#allocation5 + $0x50] sm:$0xff]
        %v531 = vld [vmem:[#allocation5 + $0x58] sm:$0xff]
        %v532 = vld [vmem:[#allocation5 + $0x60] sm:$0xff]
        %v533 = vld [vmem:[#allocation5 + $0x68] sm:$0xff]
        %v534 = vld [vmem:[#allocation5 + $0x70] sm:$0xff]
        %v535 = vld [vmem:[#allocation5 + $0x78] sm:$0xff]
        %v536 = vld [vmem:[#allocation5 + $0x80] sm:$0xff]
        %v537 = vld [vmem:[#allocation5 + $0x88] sm:$0xff]
        %v538 = vld [vmem:[#allocation5 + $0x90] sm:$0xff]
        %v539 = vld [vmem:[#allocation5 + $0x98] sm:$0xff]
        %v540 = vld [vmem:[#allocation5 + $0xa0] sm:$0xff]
        %v541 = vld [vmem:[#allocation5 + $0xa8] sm:$0xff]
        %v542 = vld [vmem:[#allocation5 + $0xb0] sm:$0xff]
        %v543 = vld [vmem:[#allocation5 + $0xb8] sm:$0xff]
        %v544 = vld [vmem:[#allocation5 + $0xc0] sm:$0xff]
        %v545 = vld [vmem:[#allocation5 + $0xc8] sm:$0xff]
        %v546 = vld [vmem:[#allocation5 + $0xd0] sm:$0xff]
        %v547 = vld [vmem:[#allocation5 + $0xd8] sm:$0xff]
        %v548 = vld [vmem:[#allocation5 + $0xe0] sm:$0xff]
        %v549 = vld [vmem:[#allocation5 + $0xe8] sm:$0xff]
        %v550 = vld [vmem:[#allocation5 + $0xf0] sm:$0xff]
        %v551 = vld [vmem:[#allocation5 + $0xf8] sm:$0xff]
        %v552 = vld [vmem:[#allocation5 + $0x100] sm:$0xff]
        %v553 = vld [vmem:[#allocation5 + $0x108] sm:$0xff]
        %v554 = vld [vmem:[#allocation5 + $0x110] sm:$0xff]
        %v555 = vld [vmem:[#allocation5 + $0x118] sm:$0xff]
        %v556 = vld [vmem:[#allocation5 + $0x120] sm:$0xff]
        %v557 = vld [vmem:[#allocation5 + $0x128] sm:$0xff]
        %v558 = vld [vmem:[#allocation5 + $0x130] sm:$0xff]
        %v559 = vld [vmem:[#allocation5 + $0x138] sm:$0xff]
        %v560 = vld [vmem:[#allocation5 + $0x140] sm:$0xff]
        %v561 = vld [vmem:[#allocation5 + $0x148] sm:$0xff]
        %v562 = vld [vmem:[#allocation5 + $0x150] sm:$0xff]
        %v563 = vld [vmem:[#allocation5 + $0x158] sm:$0xff]
        %v564 = vld [vmem:[#allocation5 + $0x160] sm:$0xff]
        %v565 = vld [vmem:[#allocation5 + $0x168] sm:$0xff]
        %v566 = vld [vmem:[#allocation5 + $0x170] sm:$0xff]
        %v567 = vld [vmem:[#allocation5 + $0x178] sm:$0xff]
        %v568 = vld [vmem:[#allocation5 + $0x180] sm:$0xff]
        %v569 = vld [vmem:[#allocation5 + $0x188] sm:$0xff]
        %v570 = vld [vmem:[#allocation5 + $0x190] sm:$0xff]
        %v571 = vld [vmem:[#allocation5 + $0x198] sm:$0xff]
        %v572 = vld [vmem:[#allocation5 + $0x1a0] sm:$0xff]
        %v573 = vld [vmem:[#allocation5 + $0x1a8] sm:$0xff]
        %v574 = vld [vmem:[#allocation5 + $0x1b0] sm:$0xff]
        %v575 = vld [vmem:[#allocation5 + $0x1b8] sm:$0xff]
        %v576 = vld [vmem:[#allocation5 + $0x1c0] sm:$0xff]
        %v577 = vld [vmem:[#allocation5 + $0x1c8] sm:$0xff]
        %v578 = vld [vmem:[#allocation5 + $0x1d0] sm:$0xff]
        %v579 = vld [vmem:[#allocation5 + $0x1d8] sm:$0xff]
        %v580 = vld [vmem:[#allocation5 + $0x1e0] sm:$0xff]
        %v581 = vld [vmem:[#allocation5 + $0x1e8] sm:$0xff]
        %v582 = vld [vmem:[#allocation5 + $0x1f0] sm:$0xff]
        %v583 = vld [vmem:[#allocation5 + $0x1f8] sm:$0xff]
        %v584 = vld [vmem:[#allocation5 + $0x200] sm:$0xff]
        %v585 = vld [vmem:[#allocation5 + $0x208] sm:$0xff]
        %v586 = vld [vmem:[#allocation5 + $0x210] sm:$0xff]
        %v587 = vld [vmem:[#allocation5 + $0x218] sm:$0xff]
        %v588 = vld [vmem:[#allocation5 + $0x220] sm:$0xff]
        %v589 = vld [vmem:[#allocation5 + $0x228] sm:$0xff]
        %v590 = vld [vmem:[#allocation5 + $0x230] sm:$0xff]
        %v591 = vld [vmem:[#allocation5 + $0x238] sm:$0xff]
        %v592 = vld [vmem:[#allocation5 + $0x240] sm:$0xff]
        %v593 = vld [vmem:[#allocation5 + $0x248] sm:$0xff]
        %v594 = vld [vmem:[#allocation5 + $0x250] sm:$0xff]
        %v595 = vld [vmem:[#allocation5 + $0x258] sm:$0xff]
        %v596 = vld [vmem:[#allocation5 + $0x260] sm:$0xff]
        %v597 = vld [vmem:[#allocation5 + $0x268] sm:$0xff]
        %v598 = vld [vmem:[#allocation5 + $0x270] sm:$0xff]
        %v599 = vld [vmem:[#allocation5 + $0x278] sm:$0xff]
        %v600 = vld [vmem:[#allocation5 + $0x280] sm:$0xff]
        %v601 = vld [vmem:[#allocation5 + $0x288] sm:$0xff]
        %v602 = vld [vmem:[#allocation5 + $0x290] sm:$0xff]
        %v603 = vld [vmem:[#allocation5 + $0x298] sm:$0xff]
        %v604 = vld [vmem:[#allocation5 + $0x2a0] sm:$0xff]
        %v605 = vld [vmem:[#allocation5 + $0x2a8] sm:$0xff]
        %v606 = vld [vmem:[#allocation5 + $0x2b0] sm:$0xff]
        %v607 = vld [vmem:[#allocation5 + $0x2b8] sm:$0xff]
        %v608 = vld [vmem:[#allocation5 + $0x2c0] sm:$0xff]
        %v609 = vld [vmem:[#allocation5 + $0x2c8] sm:$0xff]
        %v610 = vld [vmem:[#allocation5 + $0x2d0] sm:$0xff]
        %v611 = vld [vmem:[#allocation5 + $0x2d8] sm:$0xff]
        %v612 = vld [vmem:[#allocation5 + $0x2e0] sm:$0xff]
        %v613 = vld [vmem:[#allocation5 + $0x2e8] sm:$0xff]
        %v614 = vld [vmem:[#allocation5 + $0x2f0] sm:$0xff]
        %v615 = vld [vmem:[#allocation5 + $0x2f8] sm:$0xff]
        %v616 = vadd.f32 %v344, %v520
        %v617 = vadd.f32 %v440, %v521
        %v618 = vadd.f32 %v345, %v522
        %v619 = vadd.f32 %v441, %v523
        %v620 = vadd.f32 %v346, %v524
        %v621 = vadd.f32 %v442, %v525
        %v622 = vadd.f32 %v347, %v526
        %v623 = vadd.f32 %v443, %v527
        %v624 = vadd.f32 %v348, %v528
        %v625 = vadd.f32 %v444, %v529
        %v626 = vadd.f32 %v349, %v530
        %v627 = vadd.f32 %v445, %v531
        %v628 = vadd.f32 %v350, %v532
        %v629 = vadd.f32 %v446, %v533
        %v630 = vadd.f32 %v351, %v534
        %v631 = vadd.f32 %v447, %v535
        %v632 = vadd.f32 %v352, %v536
        %v633 = vadd.f32 %v448, %v537
        %v634 = vadd.f32 %v353, %v538
        %v635 = vadd.f32 %v449, %v539
        %v636 = vadd.f32 %v354, %v540
        %v637 = vadd.f32 %v450, %v541
        %v638 = vadd.f32 %v355, %v542
        %v639 = vadd.f32 %v451, %v543
        %v640 = vadd.f32 %v356, %v544
        %v641 = vadd.f32 %v452, %v545
        %v642 = vadd.f32 %v357, %v546
        %v643 = vadd.f32 %v453, %v547
        %v644 = vadd.f32 %v358, %v548
        %v645 = vadd.f32 %v454, %v549
        %v646 = vadd.f32 %v359, %v550
        %v647 = vadd.f32 %v455, %v551
        %v648 = vadd.f32 %v376, %v552
        %v649 = vadd.f32 %v472, %v553
        %v650 = vadd.f32 %v377, %v554
        %v651 = vadd.f32 %v473, %v555
        %v652 = vadd.f32 %v378, %v556
        %v653 = vadd.f32 %v474, %v557
        %v654 = vadd.f32 %v379, %v558
        %v655 = vadd.f32 %v475, %v559
        %v656 = vadd.f32 %v380, %v560
        %v657 = vadd.f32 %v476, %v561
        %v658 = vadd.f32 %v381, %v562
        %v659 = vadd.f32 %v477, %v563
        %v660 = vadd.f32 %v382, %v564
        %v661 = vadd.f32 %v478, %v565
        %v662 = vadd.f32 %v383, %v566
        %v663 = vadd.f32 %v479, %v567
        %v664 = vadd.f32 %v384, %v568
        %v665 = vadd.f32 %v480, %v569
        %v666 = vadd.f32 %v385, %v570
        %v667 = vadd.f32 %v481, %v571
        %v668 = vadd.f32 %v386, %v572
        %v669 = vadd.f32 %v482, %v573
        %v670 = vadd.f32 %v387, %v574
        %v671 = vadd.f32 %v483, %v575
        %v672 = vadd.f32 %v388, %v576
        %v673 = vadd.f32 %v484, %v577
        %v674 = vadd.f32 %v389, %v578
        %v675 = vadd.f32 %v485, %v579
        %v676 = vadd.f32 %v390, %v580
        %v677 = vadd.f32 %v486, %v581
        %v678 = vadd.f32 %v391, %v582
        %v679 = vadd.f32 %v487, %v583
        %v680 = vadd.f32 %v408, %v584
        %v681 = vadd.f32 %v504, %v585
        %v682 = vadd.f32 %v409, %v586
        %v683 = vadd.f32 %v505, %v587
        %v684 = vadd.f32 %v410, %v588
        %v685 = vadd.f32 %v506, %v589
        %v686 = vadd.f32 %v411, %v590
        %v687 = vadd.f32 %v507, %v591
        %v688 = vadd.f32 %v412, %v592
        %v689 = vadd.f32 %v508, %v593
        %v690 = vadd.f32 %v413, %v594
        %v691 = vadd.f32 %v509, %v595
        %v692 = vadd.f32 %v414, %v596
        %v693 = vadd.f32 %v510, %v597
        %v694 = vadd.f32 %v415, %v598
        %v695 = vadd.f32 %v511, %v599
        %v696 = vadd.f32 %v416, %v600
        %v697 = vadd.f32 %v512, %v601
        %v698 = vadd.f32 %v417, %v602
        %v699 = vadd.f32 %v513, %v603
        %v700 = vadd.f32 %v418, %v604
        %v701 = vadd.f32 %v514, %v605
        %v702 = vadd.f32 %v419, %v606
        %v703 = vadd.f32 %v515, %v607
        %v704 = vadd.f32 %v420, %v608
        %v705 = vadd.f32 %v516, %v609
        %v706 = vadd.f32 %v421, %v610
        %v707 = vadd.f32 %v517, %v611
        %v708 = vadd.f32 %v422, %v612
        %v709 = vadd.f32 %v518, %v613
        %v710 = vadd.f32 %v423, %v614
        %v711 = vadd.f32 %v519, %v615
        %712 = vst [vmem:[%s225] sm:$0xff] %v616
        %713 = vst [vmem:[%s225 + $0x8] sm:$0xff] %v617
        %714 = vst [vmem:[%s225 + $0x10] sm:$0xff] %v618
        %715 = vst [vmem:[%s225 + $0x18] sm:$0xff] %v619
        %716 = vst [vmem:[%s225 + $0x20] sm:$0xff] %v620
        %717 = vst [vmem:[%s225 + $0x28] sm:$0xff] %v621
        %718 = vst [vmem:[%s225 + $0x30] sm:$0xff] %v622
        %719 = vst [vmem:[%s225 + $0x38] sm:$0xff] %v623
        %720 = vst [vmem:[%s225 + $0x40] sm:$0xff] %v624
        %721 = vst [vmem:[%s225 + $0x48] sm:$0xff] %v625
        %722 = vst [vmem:[%s225 + $0x50] sm:$0xff] %v626
        %723 = vst [vmem:[%s225 + $0x58] sm:$0xff] %v627
        %724 = vst [vmem:[%s225 + $0x60] sm:$0xff] %v628
        %725 = vst [vmem:[%s225 + $0x68] sm:$0xff] %v629
        %726 = vst [vmem:[%s225 + $0x70] sm:$0xff] %v630
        %727 = vst [vmem:[%s225 + $0x78] sm:$0xff] %v631
        %728 = vst [vmem:[%s225 + $0x80] sm:$0xff] %v632
        %729 = vst [vmem:[%s225 + $0x88] sm:$0xff] %v633
        %730 = vst [vmem:[%s225 + $0x90] sm:$0xff] %v634
        %731 = vst [vmem:[%s225 + $0x98] sm:$0xff] %v635
        %732 = vst [vmem:[%s225 + $0xa0] sm:$0xff] %v636
        %733 = vst [vmem:[%s225 + $0xa8] sm:$0xff] %v637
        %734 = vst [vmem:[%s225 + $0xb0] sm:$0xff] %v638
        %735 = vst [vmem:[%s225 + $0xb8] sm:$0xff] %v639
        %736 = vst [vmem:[%s225 + $0xc0] sm:$0xff] %v640
        %737 = vst [vmem:[%s225 + $0xc8] sm:$0xff] %v641
        %738 = vst [vmem:[%s225 + $0xd0] sm:$0xff] %v642
        %739 = vst [vmem:[%s225 + $0xd8] sm:$0xff] %v643
        %740 = vst [vmem:[%s225 + $0xe0] sm:$0xff] %v644
        %741 = vst [vmem:[%s225 + $0xe8] sm:$0xff] %v645
        %742 = vst [vmem:[%s225 + $0xf0] sm:$0xff] %v646
        %743 = vst [vmem:[%s225 + $0xf8] sm:$0xff] %v647
        %744 = vst [vmem:[%s225 + $0x100] sm:$0xff] %v648
        %745 = vst [vmem:[%s225 + $0x108] sm:$0xff] %v649
        %746 = vst [vmem:[%s225 + $0x110] sm:$0xff] %v650
        %747 = vst [vmem:[%s225 + $0x118] sm:$0xff] %v651
        %748 = vst [vmem:[%s225 + $0x120] sm:$0xff] %v652
        %749 = vst [vmem:[%s225 + $0x128] sm:$0xff] %v653
        %750 = vst [vmem:[%s225 + $0x130] sm:$0xff] %v654
        %751 = vst [vmem:[%s225 + $0x138] sm:$0xff] %v655
        %752 = vst [vmem:[%s225 + $0x140] sm:$0xff] %v656
        %753 = vst [vmem:[%s225 + $0x148] sm:$0xff] %v657
        %754 = vst [vmem:[%s225 + $0x150] sm:$0xff] %v658
        %755 = vst [vmem:[%s225 + $0x158] sm:$0xff] %v659
        %756 = vst [vmem:[%s225 + $0x160] sm:$0xff] %v660
        %757 = vst [vmem:[%s225 + $0x168] sm:$0xff] %v661
        %758 = vst [vmem:[%s225 + $0x170] sm:$0xff] %v662
        %759 = vst [vmem:[%s225 + $0x178] sm:$0xff] %v663
        %760 = vst [vmem:[%s225 + $0x180] sm:$0xff] %v664
        %761 = vst [vmem:[%s225 + $0x188] sm:$0xff] %v665
        %762 = vst [vmem:[%s225 + $0x190] sm:$0xff] %v666
        %763 = vst [vmem:[%s225 + $0x198] sm:$0xff] %v667
        %764 = vst [vmem:[%s225 + $0x1a0] sm:$0xff] %v668
        %765 = vst [vmem:[%s225 + $0x1a8] sm:$0xff] %v669
        %766 = vst [vmem:[%s225 + $0x1b0] sm:$0xff] %v670
        %767 = vst [vmem:[%s225 + $0x1b8] sm:$0xff] %v671
        %768 = vst [vmem:[%s225 + $0x1c0] sm:$0xff] %v672
        %769 = vst [vmem:[%s225 + $0x1c8] sm:$0xff] %v673
        %770 = vst [vmem:[%s225 + $0x1d0] sm:$0xff] %v674
        %771 = vst [vmem:[%s225 + $0x1d8] sm:$0xff] %v675
        %772 = vst [vmem:[%s225 + $0x1e0] sm:$0xff] %v676
        %773 = vst [vmem:[%s225 + $0x1e8] sm:$0xff] %v677
        %774 = vst [vmem:[%s225 + $0x1f0] sm:$0xff] %v678
        %775 = vst [vmem:[%s225 + $0x1f8] sm:$0xff] %v679
        %776 = vst [vmem:[%s225 + $0x200] sm:$0xff] %v680
        %777 = vst [vmem:[%s225 + $0x208] sm:$0xff] %v681
        %778 = vst [vmem:[%s225 + $0x210] sm:$0xff] %v682
        %779 = vst [vmem:[%s225 + $0x218] sm:$0xff] %v683
        %780 = vst [vmem:[%s225 + $0x220] sm:$0xff] %v684
        %781 = vst [vmem:[%s225 + $0x228] sm:$0xff] %v685
        %782 = vst [vmem:[%s225 + $0x230] sm:$0xff] %v686
        %783 = vst [vmem:[%s225 + $0x238] sm:$0xff] %v687
        %784 = vst [vmem:[%s225 + $0x240] sm:$0xff] %v688
        %785 = vst [vmem:[%s225 + $0x248] sm:$0xff] %v689
        %786 = vst [vmem:[%s225 + $0x250] sm:$0xff] %v690
        %787 = vst [vmem:[%s225 + $0x258] sm:$0xff] %v691
        %788 = vst [vmem:[%s225 + $0x260] sm:$0xff] %v692
        %789 = vst [vmem:[%s225 + $0x268] sm:$0xff] %v693
        %790 = vst [vmem:[%s225 + $0x270] sm:$0xff] %v694
        %791 = vst [vmem:[%s225 + $0x278] sm:$0xff] %v695
        %792 = vst [vmem:[%s225 + $0x280] sm:$0xff] %v696
        %793 = vst [vmem:[%s225 + $0x288] sm:$0xff] %v697
        %794 = vst [vmem:[%s225 + $0x290] sm:$0xff] %v698
        %795 = vst [vmem:[%s225 + $0x298] sm:$0xff] %v699
        %796 = vst [vmem:[%s225 + $0x2a0] sm:$0xff] %v700
        %797 = vst [vmem:[%s225 + $0x2a8] sm:$0xff] %v701
        %798 = vst [vmem:[%s225 + $0x2b0] sm:$0xff] %v702
        %799 = vst [vmem:[%s225 + $0x2b8] sm:$0xff] %v703
        %800 = vst [vmem:[%s225 + $0x2c0] sm:$0xff] %v704
        %801 = vst [vmem:[%s225 + $0x2c8] sm:$0xff] %v705
        %802 = vst [vmem:[%s225 + $0x2d0] sm:$0xff] %v706
        %803 = vst [vmem:[%s225 + $0x2d8] sm:$0xff] %v707
        %804 = vst [vmem:[%s225 + $0x2e0] sm:$0xff] %v708
        %805 = vst [vmem:[%s225 + $0x2e8] sm:$0xff] %v709
        %806 = vst [vmem:[%s225 + $0x2f0] sm:$0xff] %v710
        %807 = vst [vmem:[%s225 + $0x2f8] sm:$0xff] %v711
        %s808 = sand.u32 %s109, 1
        %s809 = scalar_lea.sflag [#allocation4], %s808
        %s810 = sand.u32 %s109, 1
        %s811 = smul.addr %s810, 768
        %s812 = scalar_lea.vmem [#allocation7], %s811
        // Predicated region
        $region37: #{tpu_custom_call.1} parent=27 // pred_check
          %p813 = pneg %p119
        $region38: #{tpu_custom_call.1} parent=27 // pred_check_branch
          %815 = sbr.rel (%p813) target = $region40
        $region39: #{tpu_custom_call.1} parent=27 // pred_region
          %s816 = smul.u32 48, %s25
          %s817 = smul.u32 2, %s26
          %819 = vsyncadd %s809, 0
          %s820 = smul.addr %s816, 2
          %s821 = sadd.s32 %s817, %s820
          %s822 = smul.addr %s27, 96
          %s823 = sadd.s32 %s821, %s822
          %s824 = smul.addr %s823, 8
          %s825 = scalar_lea.hbm %s2, %s824
          %s826 = sshll.u32 %s812, 4
          %s827 = int_to_ptr.vmem [resolvable:$true] %s826
          %s828 = sshll.u32 %s825, 4
          %s829 = int_to_ptr.hbm [resolvable:$true] %s828
          %834 = dma.vmem_to_hbm [thread:$0]  %s827, 12288, %s829, %s809, 256, 256, 16
        $region40: #{tpu_custom_call.1} parent=27 // pred_fallthru
          _
      $region28: #{tpu_custom_call.1} parent=5 // pred_fallthru
        _
      %p835 = scmp.le.s32.totalorder 2, %s15
      // Predicated region
      $region41: #{tpu_custom_call.1} parent=5 // pred_check
        %p836 = pneg %p835
      $region42: #{tpu_custom_call.1} parent=5 // pred_check_branch
        %838 = sbr.rel (%p836) target = $region44
      $region43: #{tpu_custom_call.1} parent=5 // pred_region
        %s839 = ssub.s32 %s15, 2
        // Predicated region
        $region45: #{tpu_custom_call.1} parent=43 // pred_check
          %p840 = pneg %p125
        $region46: #{tpu_custom_call.1} parent=43 // pred_check_branch
          %842 = sbr.rel (%p840) target = $region48
        $region47: #{tpu_custom_call.1} parent=43 // pred_region
          %s843 = sand.u32 %s110, 1
          %s844 = scalar_lea.sflag [#allocation4], %s843
          %s845 = sand.u32 %s110, 1
          %s846 = smul.addr %s845, 768
          %s847 = scalar_lea.vmem [#allocation7], %s846
          %849 = dma.done %s844, 12288
        $region48: #{tpu_custom_call.1} parent=43 // pred_fallthru
          _
      $region44: #{tpu_custom_call.1} parent=5 // pred_fallthru
        _
    $region6: #{tpu_custom_call.1} parent=1 // loop_footer
      %s19 = sadd.s32 1, %s15
    $region7: #{tpu_custom_call.1} parent=1 // loop_footer_branch
      %14 = sbr.rel target = $region3
    $region8: #{tpu_custom_call.1} parent=1 // loop_exit
      _
    %850 = vsyncpa [#allocation3], 1
    %s851 = scalar_lea.sflag [#allocation3], 1
    %852 = vsyncpa %s851, 1
    %853 = vsyncpa [#allocation6], 1
    %854 = vsyncpa [#allocation4], 1
    %s855 = scalar_lea.sflag [#allocation4], 1
    %856 = vsyncpa %s855, 1

</llo_original>
